<compile_context>
chip_gen: v6e
topology: v6e:2x2x1
jax: 0.10.0
libtpu: 0.0.40
codegen_flags: <defaults>
</compile_context>

<pallas_src>
import functools

import jax
import jax.numpy as jnp
from jax.experimental import pallas as pl
from jax.experimental.pallas import tpu as pltpu


def _gap1d_kernel_single(x_ref, o_ref, *, inv_l):
    # x_ref: (TN, C, L) tile; o_ref: (TN, C).
    s = jnp.sum(x_ref[...], axis=-1, dtype=jnp.float32)   # f32 accumulate
    o_ref[...] = (s * inv_l).astype(o_ref.dtype)


def _gap1d_kernel_tiled(x_ref, o_ref, acc_ref, *, inv_l, true_l, tl, needs_mask):
    # x_ref: (TN, TC, TL) tile; o_ref: (TN, TC); acc_ref: (TN, TC) f32 scratch.
    li = pl.program_id(2)                 # reduction axis is the last grid axis
    last = pl.num_programs(2) - 1

    @pl.when(li == 0)
    def _init():
        acc_ref[...] = jnp.zeros_like(acc_ref)

    if needs_mask:
        # Full blocks: plain accumulate (no iota/where on the hot path).
        @pl.when(li < last)
        def _acc_full():
            acc_ref[...] += jnp.sum(x_ref[...], axis=-1, dtype=jnp.float32)

        # Final (ragged) block: zero the padded tail along L before summing.
        @pl.when(li == last)
        def _acc_masked():
            x = x_ref[...]
            lane = jax.lax.broadcasted_iota(jnp.int32, x.shape, 2) + li * tl
            x = jnp.where(lane < true_l, x, jnp.zeros_like(x))
            acc_ref[...] += jnp.sum(x, axis=-1, dtype=jnp.float32)
    else:
        acc_ref[...] += jnp.sum(x_ref[...], axis=-1, dtype=jnp.float32)

    @pl.when(li == last)
    def _finalize():
        # Divide by the true L (not block TL); single down-cast at the end.
        o_ref[...] = (acc_ref[...] * inv_l).astype(o_ref.dtype)


def _round_up(v, m):
    return ((v + m - 1) // m) * m


def _choose_tiles(N, C, L, itemsize, target_bytes):
    """Pick (TN, TC, TL) so a per-step input tile is ~target_bytes.

    Tile-shape constraints honoured:
      * input block (TN, TC, TL): TC multiple of 8 or == C; TL multiple of 128
        or == L.
      * output block (TN, TC): TN multiple of 8 or == N; TC multiple of 128
        or == C.
    """
    row_bytes = C * L * itemsize
    if row_bytes <= target_bytes:
        # Whole (C, L) per step: block several batch rows together.
        tn = max(1, target_bytes // row_bytes)
        if tn >= N:
            tn = N
        else:
            tn = min(N, max(8, (tn // 8) * 8))
        if tn == N and N > 8:
            # Keep >= 2 batch grid steps so megacore parts can split the
            # "parallel" axis across TensorCores.
            tn = min(N, _round_up((N + 1) // 2, 8))
        return int(tn), int(C), int(L)

    # C*L too big for one step: tile the reduction (L) axis (TL % 128 == 0).
    tn = min(N, 8)                       # 8 (mult of 8) or == N: both legal
    tl = (target_bytes // (tn * C * itemsize) // 128) * 128
    if tl >= 128:
        return int(tn), int(C), int(min(tl, L))

    # Even (tn, C, 128) exceeds the budget: also tile C (TC % 128 == 0).
    tl = 128
    tc = (target_bytes // (tn * tl * itemsize) // 128) * 128
    tc = max(128, tc)
    if tc >= C:
        tc = C
    return int(tn), int(tc), int(tl)


def gap1d(x: jax.Array, *, target_tile_bytes: int = 2 * 1024 * 1024) -> jax.Array:
    """Global Adaptive Avg Pool (output_size=1) + Flatten.

    Args:
      x: (N, C, L) array.
    Returns:
      (N, C) array, same dtype as x.
    """
    N, C, L = x.shape
    itemsize = jnp.dtype(x.dtype).itemsize
    tn, tc, tl = _choose_tiles(N, C, L, itemsize, target_tile_bytes)
    inv_l = float(1.0 / L)
    out_shape = jax.ShapeDtypeStruct((N, C), x.dtype)

    if tl == L and tc == C:
        # Single reduction step over L: simple batch-tiled kernel.
        kernel = functools.partial(_gap1d_kernel_single, inv_l=inv_l)
        return pl.pallas_call(
            kernel,
            out_shape=out_shape,
            grid_spec=pltpu.PrefetchScalarGridSpec(
                num_scalar_prefetch=0,
                grid=(pl.cdiv(N, tn),),
                in_specs=[pl.BlockSpec((tn, C, L), lambda n: (n, 0, 0))],
                out_specs=pl.BlockSpec((tn, C), lambda n: (n, 0)),
            ),
            compiler_params=pltpu.CompilerParams(
                dimension_semantics=("parallel",),
            ),
        )(x)

    # Tiled path: 3-D grid, reduction axis last, f32 accumulator scratch.
    kernel = functools.partial(
        _gap1d_kernel_tiled,
        inv_l=inv_l,
        true_l=L,
        tl=tl,
        needs_mask=(L % tl != 0),
    )
    return pl.pallas_call(
        kernel,
        out_shape=out_shape,
        grid_spec=pltpu.PrefetchScalarGridSpec(
            num_scalar_prefetch=0,
            grid=(pl.cdiv(N, tn), pl.cdiv(C, tc), pl.cdiv(L, tl)),
            in_specs=[pl.BlockSpec((tn, tc, tl), lambda n, c, l: (n, c, l))],
            out_specs=pl.BlockSpec((tn, tc), lambda n, c, l: (n, c)),
            scratch_shapes=[pltpu.VMEM((tn, tc), jnp.float32)],
        ),
        compiler_params=pltpu.CompilerParams(
            dimension_semantics=("parallel", "parallel", "arbitrary"),
        ),
    )(x)


if __name__ == "__main__":
    key = jax.random.PRNGKey(0)

    # Primary small check: (N, C, L) consistent with GAP1d.forward.
    N, C, L = 2, 4, 16
    x = jax.random.normal(key, (N, C, L), dtype=jnp.float32)
    out = jax.block_until_ready(gap1d(x))
    ref = jnp.mean(x, axis=-1)
    assert out.shape == (N, C), out.shape
    assert jnp.allclose(out, ref, atol=1e-5, rtol=1e-5), (out, ref)

    # L-tiled (accumulator) path with a ragged tail block along L.
    k2 = jax.random.PRNGKey(1)
    x2 = jax.random.normal(k2, (4, 16, 400), dtype=jnp.float32)
    out2 = jax.block_until_ready(gap1d(x2, target_tile_bytes=8 * 1024))
    ref2 = jnp.mean(x2, axis=-1)
    assert jnp.allclose(out2, ref2, atol=1e-5, rtol=1e-5), (out2, ref2)

    # C-tiled + L-tiled path (large C*L relative to the byte budget).
    k3 = jax.random.PRNGKey(2)
    x3 = jax.random.normal(k3, (2, 256, 512), dtype=jnp.float32)
    out3 = jax.block_until_ready(gap1d(x3, target_tile_bytes=64 * 1024))
    ref3 = jnp.mean(x3, axis=-1)
    assert jnp.allclose(out3, ref3, atol=1e-5, rtol=1e-5), (out3, ref3)

    # Batch-tail blocks (N not a multiple of the batch tile).
    k4 = jax.random.PRNGKey(3)
    x4 = jax.random.normal(k4, (20, 8, 32), dtype=jnp.float32)
    out4 = jax.block_until_ready(gap1d(x4))
    ref4 = jnp.mean(x4, axis=-1)
    assert jnp.allclose(out4, ref4, atol=1e-5, rtol=1e-5), (out4, ref4)

    # bf16 input: f32 accumulation inside the kernel, bf16 output.
    k5 = jax.random.PRNGKey(4)
    x5 = jax.random.normal(k5, (16, 8, 64), dtype=jnp.bfloat16)
    out5 = jax.block_until_ready(gap1d(x5))
    ref5 = jnp.mean(x5.astype(jnp.float32), axis=-1).astype(jnp.bfloat16)
    assert jnp.allclose(out5.astype(jnp.float32), ref5.astype(jnp.float32),
                        atol=2e-2, rtol=2e-2), (out5, ref5)

    print("KERNEL_OK")
</pallas_src>

<mosaic_0001>
module attributes {stable_mosaic.version = 11 : i64} {
  func.func @_gap1d_kernel_single(%arg0: i32, %arg1: memref<2x4x16xf32, #tpu.memory_space<vmem>>, %arg2: memref<2x4xf32, #tpu.memory_space<vmem>>) attributes {dimension_semantics = [#tpu.dimension_semantics<parallel>], iteration_bounds = array<i64: 1>, scalar_prefetch = 0 : i64, scratch_operands = 0 : i64, tpu.core_type = #tpu.core_type<tc>, window_params = [{transform_indices = @transform_0, window_bounds = array<i64: 2, 4, 16>}, {transform_indices = @transform_1, window_bounds = array<i64: 2, 4>}]} {
    %c0 = arith.constant 0 : index
    %c0_0 = arith.constant 0 : index
    %c0_1 = arith.constant 0 : index
    %0 = vector.load %arg1[%c0, %c0_0, %c0_1] : memref<2x4x16xf32, #tpu.memory_space<vmem>>, vector<2x4x16xf32>
    %cst = arith.constant dense<0.000000e+00> : vector<2x4xf32>
    %1 = vector.multi_reduction <add>, %0, %cst [2] : vector<2x4x16xf32> to vector<2x4xf32>
    %cst_2 = arith.constant 6.250000e-02 : f32
    %2 = vector.broadcast %cst_2 : f32 to vector<2x4xf32>
    %3 = arith.mulf %1, %2 : vector<2x4xf32>
    %c0_3 = arith.constant 0 : index
    %c0_4 = arith.constant 0 : index
    %4 = vector.load %arg2[%c0_3, %c0_4] : memref<2x4xf32, #tpu.memory_space<vmem>>, vector<2x4xf32>
    tpu.vector_store %arg2[%c0_3, %c0_4], %3 {strides = array<i32>} : memref<2x4xf32, #tpu.memory_space<vmem>>, vector<2x4xf32>,
    return
  }
  func.func @transform_0(%arg0: i32) -> (i32, i32, i32) {
    %c0_i32 = arith.constant 0 : i32
    %c0_i32_0 = arith.constant 0 : i32
    %c0_i32_1 = arith.constant 0 : i32
    return %arg0, %c0_i32, %c0_i32_0 : i32, i32, i32
  }
  func.func @transform_1(%arg0: i32) -> (i32, i32) {
    %c0_i32 = arith.constant 0 : i32
    %c0_i32_0 = arith.constant 0 : i32
    return %arg0, %c0_i32 : i32, i32
  }
}

</mosaic_0001>

<llo_original>
// kernel: tpu_custom_call.1
$region0: #{tpu_custom_call.1}
  #allocation0 [shape = 'u32[]', space=smem, size = 0x4, offset = 0x4, fixed_abs, tag = 'smem constant byte address 0x4 - core index']
  #allocation1 [shape = 'u32[144,128]{1,0:T(1,128)}', space=vmem, size = 0x12000, scoped, tag = 'internal scratch']
  %s0 = inlined_call_operand.hbm [shape: f32[2,4,16], index: 0, kind: input, shape index: {}]
  %s1 = inlined_call_operand.hbm [shape: f32[2,4], index: 1, kind: output, shape index: {}]
  %s2 = sld [smem:[#allocation0]]
  $region18: #{tpu_custom_call.1} parent=0
    _
  %s4 = ssub.s32 1, %s2
  %s5 = scalar_select 0, %s4, %s2
  $region1: #{tpu_custom_call.1} parent=0
    #allocation2 [shape = 'u8[4096]{0}', space=vmem, size = 0x1000, scoped, tag = 'input window, operand 0, single buffered']
    #allocation3 [shape = 's32[1]{0}', space=sflag, size = 0x4, scoped, tag = 'scoped memory for tpu_custom_call.1']
    #allocation4 [shape = 's32[1]{0}', space=sflag, size = 0x4, scoped, tag = 'scoped memory for tpu_custom_call.1']
    #allocation5 [shape = 'u8[1024]{0}', space=vmem, size = 0x400, scoped, tag = 'output window, operand 0, single buffered']
    %6 = vsyncpa [#allocation3], 0
    %7 = vsyncpa [#allocation4], 0
    // Predicated region
    $region2: #{tpu_custom_call.1} parent=1 // pred_check
      _
    $region3: #{tpu_custom_call.1} parent=1 // pred_check_branch
      %9 = sbr.rel (0) target = $region5
    $region4: #{tpu_custom_call.1} parent=1 // pred_region
      %s11 = ssub.s32 128, 128
      %12 = vsyncadd [#allocation3], %s11
      %s13 = sshll.u32 [#allocation2], 4
      %s14 = int_to_ptr.vmem [resolvable:$true] %s13
      %19 = dma.hbm_to_vmem [thread:$0]  %s0, 128, %s14, [#allocation3], 64, 64, 4
    $region5: #{tpu_custom_call.1} parent=1 // pred_fallthru
      _
    // Predicated region
    $region6: #{tpu_custom_call.1} parent=1 // pred_check
      _
    $region7: #{tpu_custom_call.1} parent=1 // pred_check_branch
      %21 = sbr.rel (0) target = $region9
    $region8: #{tpu_custom_call.1} parent=1 // pred_region
      %22 = dma.done [#allocation3], 128
    $region9: #{tpu_custom_call.1} parent=1 // pred_fallthru
      _
    %v23 = vld [vmem:[#allocation2] sm:$0xf]
    %v24 = vld [vmem:[#allocation2 + $0x4] sm:$0xf]
    %vm25 = vcmask 125952
    %v26 = vsel %vm25, %v23, 0.0
    %27 = vadd.xlane.f32.xlu0 %v26
    %v28 = vpop.xlane.xlu0 %27
    %v29 = vsel %vm25, %v24, 0.0
    %30 = vadd.xlane.f32.xlu0 %v29
    %v31 = vpop.xlane.xlu0 %30
    %v32 = vmul.f32 %v28, 0.0625
    %v33 = vmul.f32 %v31, 0.0625
    %v36 = vlaneseq
    %v37 = vand.u32 %v36, 127
    %v38 = vlaneseq
    %v39 = vshrl.u32 %v38, 7
    %v40 = vsub.s32 %v37, %v39
    %v41 = vrot.slane %v32, %v40
    %v42 = vlaneseq
    %v43 = vshrl.u32 %v42, 7
    %v44 = vsub.s32 %v37, %v43
    %v45 = vrot.slane %v33, %v44
    %vm46 = vcmask 1041409
    %v47 = vsel %vm46, %v45, %v41
    %vm49 = vcmask 25600
    %50 = vst.msk [vmem:[#allocation5] sm:$0x3] %vm49, %v47
    // Predicated region
    $region10: #{tpu_custom_call.1} parent=1 // pred_check
      _
    $region11: #{tpu_custom_call.1} parent=1 // pred_check_branch
      %52 = sbr.rel (0) target = $region13
    $region12: #{tpu_custom_call.1} parent=1 // pred_region
      %s54 = ssub.s32 32, 32
      %55 = vsyncadd [#allocation4], %s54
      %s57 = sshll.u32 [#allocation5], 4
      %s58 = int_to_ptr.vmem [resolvable:$true] %s57
      %60 = dma.vmem_to_hbm [thread:$0]  %s58, 32, %s1, [#allocation4]
    $region13: #{tpu_custom_call.1} parent=1 // pred_fallthru
      _
    // Predicated region
    $region14: #{tpu_custom_call.1} parent=1 // pred_check
      _
    $region15: #{tpu_custom_call.1} parent=1 // pred_check_branch
      %62 = sbr.rel (0) target = $region17
    $region16: #{tpu_custom_call.1} parent=1 // pred_region
      %63 = dma.done [#allocation4], 32
    $region17: #{tpu_custom_call.1} parent=1 // pred_fallthru
      _
    %64 = vsyncpa [#allocation3], 1
    %65 = vsyncpa [#allocation4], 1

</llo_original>
